<compile_context>
chip_gen: v7x
topology: tpu7x:2x2x1
jax: 0.10.0
libtpu: 0.0.40
codegen_flags: <defaults>
</compile_context>

<pallas_src>
import functools
import math

import jax
import jax.numpy as jnp
from jax.experimental import pallas as pl
from jax.experimental.pallas import tpu as pltpu


def make_positional_encoding_table(max_len, d_model, dtype=jnp.float32):
    """Precompute pe[max_len, d_model] exactly like the PyTorch module."""
    position = jnp.arange(max_len, dtype=jnp.float32)[:, None]              # [L, 1]
    div_term = jnp.exp(
        jnp.arange(0, d_model, 2, dtype=jnp.float32)
        * (-math.log(10000.0) / d_model))                                   # [D/2]
    angles = position * div_term                                            # [L, D/2]
    pe = jnp.zeros((max_len, d_model), jnp.float32)
    pe = pe.at[:, 0::2].set(jnp.sin(angles))
    pe = pe.at[:, 1::2].set(jnp.cos(angles))
    return pe.astype(dtype)


# ----------------------------- kernels ------------------------------------ #

def _pe_add_kernel(x_ref, pe_ref, o_ref):
    # x_ref: (tb, tn); pe_ref: (1, tn) broadcast over the batch sublanes.
    o_ref[...] = (x_ref[...].astype(jnp.float32) + pe_ref[...]).astype(o_ref.dtype)


def _pe_add_dropout_kernel(x_ref, pe_ref, bits_ref, o_ref, *, threshold, scale):
    # Inverted dropout: keep iff bits >= threshold (P(keep) = 1 - p), fused
    # select with a single multiply in the kept branch.
    y = x_ref[...].astype(jnp.float32) + pe_ref[...]
    keep = bits_ref[...] >= jnp.uint32(threshold)
    o_ref[...] = jnp.where(keep, y * jnp.float32(scale),
                           jnp.float32(0.0)).astype(o_ref.dtype)


# --------------------------- tiling helpers -------------------------------- #

def _vmem_budget():
    """Return (vmem_capacity_bytes, per-block byte budget), generation-aware."""
    vmem_cap = 64 << 20  # conservative default (v7x per-TC VMEM)
    try:
        info = pltpu.get_tpu_info()
        cap = int(getattr(info, "vmem_capacity_bytes", 0))
        if cap > 0:
            vmem_cap = cap
    except Exception:
        pass
    # ~6 double-buffered blocks live at once (x, out, bits, pe) -> keep each
    # block at vmem/24, clamped to [1 MiB, 4 MiB].
    budget = int(min(4 << 20, max(1 << 20, vmem_cap // 24)))
    return vmem_cap, budget


def _pick_lane_tile(n, cap_lanes):
    """Lane tile: multiple of 128 within budget; full extent if n <= 128."""
    if n <= 128:
        return n
    cap = max(128, min(cap_lanes, n))
    t = (cap // 128) * 128
    if n % 128 == 0:
        # Prefer an evenly dividing tile (no ragged tail / masked edge stores).
        while n % t != 0:
            t -= 128
    return t


def _pick_row_tile(b, unit, cap_rows):
    """Row tile: multiple of dtype sublane unit within budget; full if b <= unit."""
    if b <= unit:
        return b
    cap = max(unit, min(cap_rows, b))
    t = (cap // unit) * unit
    if b % unit == 0:
        while b % t != 0:
            t -= unit
    return t


# ------------------------------ wrapper ------------------------------------ #

def positional_encoding(x, pe_table, *, dropout_p=0.0, training=False,
                        rng_key=None, small_input_bypass=False):
    """forward of PositionalEncoding: dropout(x + pe[:, :S]).

    x: [..., S, D]; pe_table: [max_len, D] with max_len >= S.
    Dropout is identity unless training=True and dropout_p > 0
    (matches nn.Dropout eval-mode behaviour).
    """
    *lead, S, D = x.shape
    B = 1
    for d in lead:
        B *= d
    N = S * D
    itemsize = jnp.dtype(x.dtype).itemsize
    use_dropout = training and dropout_p > 0.0

    pe_row = pe_table[:S].astype(jnp.float32).reshape(1, N)   # [1, S*D]

    if small_input_bypass and B * N * itemsize < (256 << 10):
        # Tiny inputs: a standalone Pallas call is pure launch overhead; let
        # XLA fuse the add (+ dropout) instead.
        y = x.reshape(B, N).astype(jnp.float32) + pe_row
        if use_dropout:
            k = rng_key if rng_key is not None else jax.random.PRNGKey(0)
            keep = jax.random.bernoulli(k, 1.0 - float(dropout_p), (B, N))
            y = jnp.where(keep, y * (1.0 / (1.0 - float(dropout_p))), 0.0)
        return y.astype(x.dtype).reshape(x.shape)

    x2 = x.reshape(B, N)                                      # lane-dense view

    vmem_cap, budget = _vmem_budget()
    row_unit = {4: 8, 2: 16, 1: 32}.get(itemsize, 8)          # sublane packing
    tn = _pick_lane_tile(N, budget // (row_unit * itemsize))
    tb = _pick_row_tile(B, row_unit, max(1, budget // (tn * itemsize)))

    # PE-varying (lane) axis OUTER, batch axis INNER: pe block index is
    # constant across consecutive steps, so its DMA is skipped.
    grid = (pl.cdiv(N, tn), pl.cdiv(B, tb))
    x_spec = pl.BlockSpec((tb, tn), lambda j, i: (i, j))
    pe_spec = pl.BlockSpec((1, tn), lambda j, i: (0, j))
    out_spec = pl.BlockSpec((tb, tn), lambda j, i: (i, j))

    # Actual double-buffered working set; keep vmem_limit well under physical.
    working = 2 * (tb * tn * itemsize)      # x blocks
    working += 2 * (tb * tn * itemsize)     # out blocks
    working += 2 * (tn * 4)                 # pe blocks (f32)
    if use_dropout:
        working += 2 * (tb * tn * 4)        # uint32 mask bits blocks
    vmem_limit = int(max(32 << 20,
                         min(int(1.5 * working),
                             max(32 << 20, vmem_cap - (16 << 20)))))

    if use_dropout:
        k = rng_key if rng_key is not None else jax.random.PRNGKey(0)
        bits = jax.random.bits(k, (B, N), jnp.uint32)
        threshold = min(int(round(float(dropout_p) * 4294967296.0)), 4294967295)
        kernel = functools.partial(_pe_add_dropout_kernel,
                                   threshold=threshold,
                                   scale=1.0 / (1.0 - float(dropout_p)))
        in_specs = [x_spec, pe_spec,
                    pl.BlockSpec((tb, tn), lambda j, i: (i, j))]
        args = (x2, pe_row, bits)
    else:
        kernel = _pe_add_kernel
        in_specs = [x_spec, pe_spec]
        args = (x2, pe_row)

    out = pl.pallas_call(
        kernel,
        out_shape=jax.ShapeDtypeStruct((B, N), x.dtype),
        grid_spec=pl.GridSpec(grid=grid, in_specs=in_specs, out_specs=out_spec),
        compiler_params=pltpu.CompilerParams(
            dimension_semantics=("parallel", "parallel"),
            vmem_limit_bytes=vmem_limit,
        ),
    )(*args)
    return out.reshape(x.shape)


if __name__ == "__main__":
    key = jax.random.PRNGKey(0)
    batch, seq, d_model = 2, 8, 32
    dropout_p = 0.1
    max_len = 5000  # module default

    kx, kd = jax.random.split(key)
    x = jax.random.normal(kx, (batch, seq, d_model), dtype=jnp.float32)
    pe_table = make_positional_encoding_table(max_len, d_model)

    # Eval-mode forward (dropout is identity): verify against pure-JAX reference.
    out = positional_encoding(x, pe_table, dropout_p=dropout_p, training=False)
    out = jax.block_until_ready(out)
    ref = x + pe_table[None, :seq, :]
    assert jnp.allclose(out, ref, atol=1e-6, rtol=1e-6), "eval-mode mismatch vs reference"

    # Training-mode forward: inverted dropout. Every element must be either
    # dropped (exactly 0) or the kept value scaled by 1/(1-p).
    out_tr = positional_encoding(
        x, pe_table, dropout_p=dropout_p, training=True, rng_key=kd)
    out_tr = jax.block_until_ready(out_tr)
    scaled = ref * jnp.float32(1.0 / (1.0 - dropout_p))
    ok = jnp.isclose(out_tr, 0.0, atol=1e-6) | jnp.isclose(
        out_tr, scaled, rtol=1e-5, atol=1e-6)
    assert bool(jnp.all(ok)), "training-mode dropout output malformed"

    print("KERNEL_OK")
</pallas_src>

<mosaic_0001>
module attributes {stable_mosaic.version = 11 : i64} {
  func.func @_pe_add_kernel(%arg0: i32, %arg1: i32, %arg2: memref<2x256xf32, #tpu.memory_space<vmem>>, %arg3: memref<1x256xf32, #tpu.memory_space<vmem>>, %arg4: memref<2x256xf32, #tpu.memory_space<vmem>>) attributes {dimension_semantics = [#tpu.dimension_semantics<parallel>, #tpu.dimension_semantics<parallel>], iteration_bounds = array<i64: 1, 1>, scalar_prefetch = 0 : i64, scratch_operands = 0 : i64, tpu.core_type = #tpu.core_type<tc>, window_params = [{transform_indices = @transform_0, window_bounds = array<i64: 2, 256>}, {transform_indices = @transform_1, window_bounds = array<i64: 1, 256>}, {transform_indices = @transform_2, window_bounds = array<i64: 2, 256>}]} {
    %c0 = arith.constant 0 : index
    %c0_0 = arith.constant 0 : index
    %0 = vector.load %arg2[%c0, %c0_0] : memref<2x256xf32, #tpu.memory_space<vmem>>, vector<2x256xf32>
    %c0_1 = arith.constant 0 : index
    %c0_2 = arith.constant 0 : index
    %1 = vector.load %arg3[%c0_1, %c0_2] : memref<1x256xf32, #tpu.memory_space<vmem>>, vector<1x256xf32>
    %2 = vector.broadcast %1 : vector<1x256xf32> to vector<2x256xf32>
    %3 = arith.addf %0, %2 : vector<2x256xf32>
    %c0_3 = arith.constant 0 : index
    %c0_4 = arith.constant 0 : index
    %4 = vector.load %arg4[%c0_3, %c0_4] : memref<2x256xf32, #tpu.memory_space<vmem>>, vector<2x256xf32>
    tpu.vector_store %arg4[%c0_3, %c0_4], %3 {strides = array<i32>} : memref<2x256xf32, #tpu.memory_space<vmem>>, vector<2x256xf32>,
    return
  }
  func.func @transform_0(%arg0: i32, %arg1: i32) -> (i32, i32) {
    %c0_i32 = arith.constant 0 : i32
    return %arg1, %arg0 : i32, i32
  }
  func.func @transform_1(%arg0: i32, %arg1: i32) -> (i32, i32) {
    %c0_i32 = arith.constant 0 : i32
    %c0_i32_0 = arith.constant 0 : i32
    return %c0_i32, %arg0 : i32, i32
  }
  func.func @transform_2(%arg0: i32, %arg1: i32) -> (i32, i32) {
    %c0_i32 = arith.constant 0 : i32
    return %arg1, %arg0 : i32, i32
  }
}

</mosaic_0001>

<llo_original>
// kernel: tpu_custom_call.1
$region0: #{tpu_custom_call.1}
  #allocation0 [shape = 'u32[]', space=smem, size = 0x4, offset = 0x4, fixed_abs, tag = 'smem constant byte address 0x4 - core index']
  #allocation1 [shape = 'u32[144,128]{1,0:T(1,128)}', space=vmem, size = 0x12000, scoped, tag = 'internal scratch']
  %s0 = inlined_call_operand.hbm [shape: f32[2,256], index: 0, kind: input, shape index: {}]
  %s1 = inlined_call_operand.vmem [shape: f32[1,256], index: 1, kind: input, shape index: {}]
  %s2 = inlined_call_operand.hbm [shape: f32[2,256], index: 2, kind: output, shape index: {}]
  %s3 = sld [smem:[#allocation0]]
  $region22: #{tpu_custom_call.1} parent=0
    _
  %s5 = ssub.s32 1, %s3
  %s6 = scalar_select 0, %s5, %s3
  $region1: #{tpu_custom_call.1} parent=0
    #allocation2 [shape = 'u8[2048]{0}', space=vmem, size = 0x800, scoped, tag = 'input window, operand 0, single buffered']
    #allocation3 [shape = 's32[1]{0}', space=sflag, size = 0x4, scoped, tag = 'scoped memory for tpu_custom_call.1']
    #allocation4 [shape = 's32[1]{0}', space=sflag, size = 0x4, scoped, tag = 'scoped memory for tpu_custom_call.1']
    #allocation5 [shape = 'u8[2048]{0}', space=vmem, size = 0x800, scoped, tag = 'output window, operand 0, single buffered']
    %7 = vsyncpa [#allocation3], 0
    %8 = vsyncpa [#allocation4], 0
    // Predicated region
    $region2: #{tpu_custom_call.1} parent=1 // pred_check
      _
    $region3: #{tpu_custom_call.1} parent=1 // pred_check_branch
      %10 = sbr.rel (0) target = $region5
    $region4: #{tpu_custom_call.1} parent=1 // pred_region
      %s12 = ssub.s32 64, 64
      %13 = vsyncadd [#allocation3], %s12
      %s15 = sshll.u32 [#allocation2], 4
      %s16 = int_to_ptr.vmem [resolvable:$true] %s15
      %18 = dma.hbm_to_vmem [thread:$0]  %s0, 64, %s16, [#allocation3]
    $region5: #{tpu_custom_call.1} parent=1 // pred_fallthru
      _
    // Predicated region
    $region6: #{tpu_custom_call.1} parent=1 // pred_check
      _
    $region7: #{tpu_custom_call.1} parent=1 // pred_check_branch
      %20 = sbr.rel (0) target = $region9
    $region8: #{tpu_custom_call.1} parent=1 // pred_region
      _
    $region9: #{tpu_custom_call.1} parent=1 // pred_fallthru
      _
    // Predicated region
    $region10: #{tpu_custom_call.1} parent=1 // pred_check
      _
    $region11: #{tpu_custom_call.1} parent=1 // pred_check_branch
      %22 = sbr.rel (0) target = $region13
    $region12: #{tpu_custom_call.1} parent=1 // pred_region
      %23 = dma.done [#allocation3], 64
    $region13: #{tpu_custom_call.1} parent=1 // pred_fallthru
      _
    %v24 = vld [vmem:[#allocation2] sm:$0xf]
    %v25 = vld [vmem:[%s1] sm:$0x3]
    %v27 = vlaneseq
    %v28 = vshrl.u32 %v27, 7
    %v29 = vsub.s32 0, %v28
    %v30 = vrot.slane %v25, %v29
    %v31 = vlaneseq
    %v32 = vshrl.u32 %v31, 7
    %v33 = vsub.s32 1, %v32
    %v34 = vrot.slane %v25, %v33
    %v35 = vcombine.low %v30, %v34
    %v37 = vunpack.c.l.s4 1983009808
    %v38 = vunpack.c.0.s8 %v37
    %v39 = vlaneseq
    %v40 = vshrl.u32 %v39, 7
    %v41 = vsub.s32 %v38, %v40
    %v42 = vrot.slane %v35, %v41
    %v44 = vadd.f32 %v24, %v42
    %45 = vst [vmem:[#allocation5] sm:$0xf] %v44
    // Predicated region
    $region14: #{tpu_custom_call.1} parent=1 // pred_check
      _
    $region15: #{tpu_custom_call.1} parent=1 // pred_check_branch
      %47 = sbr.rel (0) target = $region17
    $region16: #{tpu_custom_call.1} parent=1 // pred_region
      %s49 = ssub.s32 64, 64
      %50 = vsyncadd [#allocation4], %s49
      %s52 = sshll.u32 [#allocation5], 4
      %s53 = int_to_ptr.vmem [resolvable:$true] %s52
      %55 = dma.vmem_to_hbm [thread:$0]  %s53, 64, %s2, [#allocation4]
    $region17: #{tpu_custom_call.1} parent=1 // pred_fallthru
      _
    // Predicated region
    $region18: #{tpu_custom_call.1} parent=1 // pred_check
      _
    $region19: #{tpu_custom_call.1} parent=1 // pred_check_branch
      %57 = sbr.rel (0) target = $region21
    $region20: #{tpu_custom_call.1} parent=1 // pred_region
      %58 = dma.done [#allocation4], 64
    $region21: #{tpu_custom_call.1} parent=1 // pred_fallthru
      _
    %59 = vsyncpa [#allocation3], 1
    %60 = vsyncpa [#allocation4], 1

</llo_original>
